<compile_context>
chip_gen: v7x
topology: tpu7x:2x2x1
jax: 0.10.0
libtpu: 0.0.40
codegen_flags: <defaults>
</compile_context>

<pallas_src>
import jax
import jax.numpy as jnp
from jax.experimental import pallas as pl
from jax.experimental.pallas import tpu as pltpu

# Matches a small control env (e.g. CartPole-v1): 4 observations, 2 discrete actions.
# (The original module reads these from `env`; no env exists in-script.)
NUM_STATES = 4
NUM_ACTIONS = 2
HIDDEN1 = 128
HIDDEN2 = 30


def _round_up(x, m):
    return ((x + m - 1) // m) * m


# Padded / packed layout constants.
S_PAD = 16                          # NUM_STATES padded to the bf16 sublane tile
H2P = 32                            # HIDDEN2 padded 30 -> 32
A_PAD = _round_up(NUM_ACTIONS, 8)   # out-layer rows padded to a sublane tile (8)
B3_OFF = HIDDEN1 + H2P              # 160: offset of out-layer bias rows in bias blob
B_ROWS = B3_OFF + A_PAD             # 168: total bias-blob rows


def net_kernel(x_ref, w1_ref, w2_ref, w3_ref, b_ref, o_ref):
    # x: (S_PAD, block_b) bf16 -- batch on lanes, features on sublanes.
    x = x_ref[...]
    w1 = w1_ref[...]                                   # (128, 16)     bf16 = W1^T (padded)
    w2 = w2_ref[...]                                   # (32, 128)     bf16 = W2^T (padded)
    w3 = w3_ref[...]                                   # (A_PAD, 32)   bf16
    b1 = b_ref[0:HIDDEN1, :]                           # (128, 1)      f32
    b2 = b_ref[HIDDEN1:B3_OFF, :]                      # (32, 1)       f32
    b3 = b_ref[B3_OFF:B3_OFF + A_PAD, :]               # (A_PAD, 1)    f32

    # fc1 + ReLU  (bf16 MXU operands, f32 accumulation and elementwise math)
    h1 = jnp.dot(w1, x, preferred_element_type=jnp.float32)          # (128, block_b)
    h1 = jnp.maximum(h1 + b1, 0.0)

    # fc2 + ReLU
    h2 = jnp.dot(w2, h1.astype(jnp.bfloat16),
                 preferred_element_type=jnp.float32)                 # (32, block_b)
    h2 = jnp.maximum(h2 + b2, 0.0)

    # out layer (rows >= NUM_ACTIONS come from zero weight rows / zero bias)
    z8 = jnp.dot(w3, h2.astype(jnp.bfloat16),
                 preferred_element_type=jnp.float32) + b3            # (A_PAD, block_b)
    z = z8[:NUM_ACTIONS, :]                                          # (A, block_b)

    if NUM_ACTIONS == 2:
        # W3/b3 packed as (+diff, -diff): z = (d, -d) with d = logit0 - logit1,
        # so a single elementwise sigmoid yields (p0, p1) = softmax directly.
        probs = 1.0 / (1.0 + jnp.exp(-z))
    else:
        # General path: softmax over the (small) action sublane axis.
        m = jnp.max(z, axis=0, keepdims=True)
        e = jnp.exp(z - m)
        probs = e / jnp.sum(e, axis=0, keepdims=True)

    o_ref[...] = probs


def net_forward(x, w1t, w2t, w3t, b_blob, *, block_b=None, slice_output=True):
    B, S = x.shape
    assert S == NUM_STATES

    if block_b is None:
        if B <= 256:
            block_b = _round_up(B, 128)          # single grid step: launch-bound regime
        else:
            # >= 2 balanced steps so both v7x TensorCores engage via the "parallel"
            # axis; fat (up to 2048-row, multiple-of-256) blocks amortize the
            # ~0.35us/step pipeline overhead on all generations.
            block_b = min(2048, _round_up((B + 1) // 2, 256))
    B_pad = _round_up(B, block_b)

    # Batch on lanes, features on sublanes, pre-cast to bf16 (halves input DMA
    # bytes and drops the in-kernel cast of x).
    xp = jnp.zeros((S_PAD, B_pad), jnp.bfloat16)
    xp = xp.at[:NUM_STATES, :B].set(x.astype(jnp.bfloat16).T)

    grid = (B_pad // block_b,)
    out = pl.pallas_call(
        net_kernel,
        out_shape=jax.ShapeDtypeStruct((NUM_ACTIONS, B_pad), jnp.float32),
        grid_spec=pltpu.PrefetchScalarGridSpec(
            num_scalar_prefetch=0,
            grid=grid,
            in_specs=[
                pl.BlockSpec((S_PAD, block_b), lambda i: (0, i)),
                pl.BlockSpec((HIDDEN1, S_PAD), lambda i: (0, 0)),    # resident
                pl.BlockSpec((H2P, HIDDEN1), lambda i: (0, 0)),      # resident
                pl.BlockSpec((A_PAD, H2P), lambda i: (0, 0)),        # resident
                pl.BlockSpec((B_ROWS, 1), lambda i: (0, 0)),         # resident
            ],
            out_specs=pl.BlockSpec((NUM_ACTIONS, block_b), lambda i: (0, i)),
        ),
        compiler_params=pltpu.CompilerParams(
            dimension_semantics=("parallel",)),
    )(xp, w1t, w2t, w3t, b_blob)

    if not slice_output:
        # Launch-bound callers (small B) can consume the padded (A, B_pad) slab
        # directly (e.g. fuse argmax) instead of paying a second dispatched slice.
        # Columns >= B are padding and must not be read downstream.
        return out
    return out[:, :B].T


def init_params(key):
    """Mirrors the PyTorch init: weights ~ N(0, 0.1), biases ~ U(+-1/sqrt(fan_in))."""
    ks = jax.random.split(key, 6)
    w1 = 0.1 * jax.random.normal(ks[0], (NUM_STATES, HIDDEN1), jnp.float32)
    b1 = jax.random.uniform(ks[1], (HIDDEN1,), jnp.float32,
                            -1.0 / jnp.sqrt(NUM_STATES), 1.0 / jnp.sqrt(NUM_STATES))
    w2 = 0.1 * jax.random.normal(ks[2], (HIDDEN1, HIDDEN2), jnp.float32)
    b2 = jax.random.uniform(ks[3], (HIDDEN2,), jnp.float32,
                            -1.0 / jnp.sqrt(HIDDEN1), 1.0 / jnp.sqrt(HIDDEN1))
    w3 = 0.1 * jax.random.normal(ks[4], (HIDDEN2, NUM_ACTIONS), jnp.float32)
    b3 = jax.random.uniform(ks[5], (NUM_ACTIONS,), jnp.float32,
                            -1.0 / jnp.sqrt(HIDDEN2), 1.0 / jnp.sqrt(HIDDEN2))
    return w1, b1, w2, b2, w3, b3


def pack_params(w1, b1, w2, b2, w3, b3):
    """Pre-transpose + zero-pad weights to bf16 blocks and pack biases as one
    f32 column blob. For the 2-action head, the out layer is folded into
    (+diff, -diff) rows so the kernel's final matmul yields (d, -d) and a single
    sigmoid reproduces the softmax. Zero padding preserves the math exactly."""
    w1t = jnp.zeros((HIDDEN1, S_PAD), jnp.float32).at[:, :NUM_STATES].set(w1.T)
    w2t = jnp.zeros((H2P, HIDDEN1), jnp.float32).at[:HIDDEN2, :].set(w2.T)

    if NUM_ACTIONS == 2:
        dw = w3[:, 0] - w3[:, 1]                       # (HIDDEN2,)
        db = b3[0] - b3[1]
        w3t = jnp.zeros((A_PAD, H2P), jnp.float32)
        w3t = w3t.at[0, :HIDDEN2].set(dw).at[1, :HIDDEN2].set(-dw)
        b3c = jnp.stack([db, -db])
    else:
        w3t = jnp.zeros((A_PAD, H2P), jnp.float32).at[:NUM_ACTIONS, :HIDDEN2].set(w3.T)
        b3c = b3

    b_blob = jnp.zeros((B_ROWS, 1), jnp.float32)
    b_blob = b_blob.at[:HIDDEN1, 0].set(b1)
    b_blob = b_blob.at[HIDDEN1:HIDDEN1 + HIDDEN2, 0].set(b2)
    b_blob = b_blob.at[B3_OFF:B3_OFF + NUM_ACTIONS, 0].set(b3c)
    return (w1t.astype(jnp.bfloat16), w2t.astype(jnp.bfloat16),
            w3t.astype(jnp.bfloat16), b_blob)


def _reference(x, params):
    w1, b1, w2, b2, w3, b3 = params
    h1 = jnp.maximum(x @ w1 + b1, 0.0)
    h2 = jnp.maximum(h1 @ w2 + b2, 0.0)
    return jax.nn.softmax(h2 @ w3 + b3, axis=-1)


if __name__ == "__main__":
    key = jax.random.PRNGKey(0)
    pkey, xkey1, xkey2 = jax.random.split(key, 3)
    params = init_params(pkey)
    packed = pack_params(*params)

    # Small RL-inference batch (single grid step, launch-bound path).
    B = 8
    x = jax.random.normal(xkey1, (B, NUM_STATES), jnp.float32)
    out = jax.block_until_ready(net_forward(x, *packed))
    ref = _reference(x, params)
    assert out.shape == (B, NUM_ACTIONS)
    assert jnp.allclose(out, ref, atol=2e-2), "mismatch vs reference (B=8)"
    assert jnp.allclose(jnp.sum(out, axis=-1), 1.0, atol=1e-5)

    # Larger, non-multiple batch: exercises 2 balanced "parallel" grid steps.
    B2 = 300
    x2 = jax.random.normal(xkey2, (B2, NUM_STATES), jnp.float32)
    out2 = jax.block_until_ready(net_forward(x2, *packed))
    ref2 = _reference(x2, params)
    assert out2.shape == (B2, NUM_ACTIONS)
    assert jnp.allclose(out2, ref2, atol=2e-2), "mismatch vs reference (B=300)"
    assert jnp.allclose(jnp.sum(out2, axis=-1), 1.0, atol=1e-5)

    print("KERNEL_OK")
</pallas_src>

<mosaic_0001>
module attributes {stable_mosaic.version = 11 : i64} {
  func.func @net_kernel(%arg0: i32, %arg1: memref<16x128xbf16, #tpu.memory_space<vmem>>, %arg2: memref<128x16xbf16, #tpu.memory_space<vmem>>, %arg3: memref<32x128xbf16, #tpu.memory_space<vmem>>, %arg4: memref<8x32xbf16, #tpu.memory_space<vmem>>, %arg5: memref<168x1xf32, #tpu.memory_space<vmem>>, %arg6: memref<2x128xf32, #tpu.memory_space<vmem>>) attributes {dimension_semantics = [#tpu.dimension_semantics<parallel>], iteration_bounds = array<i64: 1>, scalar_prefetch = 0 : i64, scratch_operands = 0 : i64, tpu.core_type = #tpu.core_type<tc>, window_params = [{transform_indices = @transform_0, window_bounds = array<i64: 16, 128>}, {pipeline_mode = #tpu.pipeline_mode<synchronous>, transform_indices = @transform_1, window_bounds = array<i64: 128, 16>}, {pipeline_mode = #tpu.pipeline_mode<synchronous>, transform_indices = @transform_2, window_bounds = array<i64: 32, 128>}, {pipeline_mode = #tpu.pipeline_mode<synchronous>, transform_indices = @transform_3, window_bounds = array<i64: 8, 32>}, {pipeline_mode = #tpu.pipeline_mode<synchronous>, transform_indices = @transform_4, window_bounds = array<i64: 168, 1>}, {transform_indices = @transform_5, window_bounds = array<i64: 2, 128>}]} {
    %c0 = arith.constant 0 : index
    %c0_0 = arith.constant 0 : index
    %0 = vector.load %arg1[%c0, %c0_0] : memref<16x128xbf16, #tpu.memory_space<vmem>>, vector<16x128xbf16>
    %c0_1 = arith.constant 0 : index
    %c0_2 = arith.constant 0 : index
    %1 = vector.load %arg2[%c0_1, %c0_2] : memref<128x16xbf16, #tpu.memory_space<vmem>>, vector<128x16xbf16>
    %c0_3 = arith.constant 0 : index
    %c0_4 = arith.constant 0 : index
    %2 = vector.load %arg3[%c0_3, %c0_4] : memref<32x128xbf16, #tpu.memory_space<vmem>>, vector<32x128xbf16>
    %c0_5 = arith.constant 0 : index
    %c0_6 = arith.constant 0 : index
    %3 = vector.load %arg4[%c0_5, %c0_6] : memref<8x32xbf16, #tpu.memory_space<vmem>>, vector<8x32xbf16>
    %c0_7 = arith.constant 0 : index
    %c0_8 = arith.constant 0 : index
    %4 = vector.load %arg5[%c0_7, %c0_8] : memref<168x1xf32, #tpu.memory_space<vmem>>, vector<128x1xf32>
    %c128 = arith.constant 128 : index
    %c0_9 = arith.constant 0 : index
    %5 = vector.load %arg5[%c128, %c0_9] : memref<168x1xf32, #tpu.memory_space<vmem>>, vector<32x1xf32>
    %c160 = arith.constant 160 : index
    %c0_10 = arith.constant 0 : index
    %6 = vector.load %arg5[%c160, %c0_10] : memref<168x1xf32, #tpu.memory_space<vmem>>, vector<8x1xf32>
    %cst = arith.constant dense<0.000000e+00> : vector<128x128xf32>
    %7 = tpu.matmul %1, %0, %cst {dimension_numbers = #tpu.dot_dimension_numbers<[1], [0], [0], [1], [0, 0, 1, 1], [], []>} : vector<128x16xbf16>, vector<16x128xbf16>, vector<128x128xf32> -> vector<128x128xf32>
    %8 = vector.broadcast %4 : vector<128x1xf32> to vector<128x128xf32>
    %9 = arith.addf %7, %8 : vector<128x128xf32>
    %cst_11 = arith.constant 0.000000e+00 : f32
    %10 = vector.broadcast %cst_11 : f32 to vector<128x128xf32>
    %11 = arith.maximumf %9, %10 : vector<128x128xf32>
    %12 = arith.truncf %11 : vector<128x128xf32> to vector<128x128xbf16>
    %cst_12 = arith.constant dense<0.000000e+00> : vector<32x128xf32>
    %13 = tpu.matmul %2, %12, %cst_12 {dimension_numbers = #tpu.dot_dimension_numbers<[1], [0], [0], [1], [0, 0, 1, 1], [], []>} : vector<32x128xbf16>, vector<128x128xbf16>, vector<32x128xf32> -> vector<32x128xf32>
    %14 = vector.broadcast %5 : vector<32x1xf32> to vector<32x128xf32>
    %15 = arith.addf %13, %14 : vector<32x128xf32>
    %cst_13 = arith.constant 0.000000e+00 : f32
    %16 = vector.broadcast %cst_13 : f32 to vector<32x128xf32>
    %17 = arith.maximumf %15, %16 : vector<32x128xf32>
    %18 = arith.truncf %17 : vector<32x128xf32> to vector<32x128xbf16>
    %cst_14 = arith.constant dense<0.000000e+00> : vector<8x128xf32>
    %19 = tpu.matmul %3, %18, %cst_14 {dimension_numbers = #tpu.dot_dimension_numbers<[1], [0], [0], [1], [0, 0, 1, 1], [], []>} : vector<8x32xbf16>, vector<32x128xbf16>, vector<8x128xf32> -> vector<8x128xf32>
    %20 = vector.broadcast %6 : vector<8x1xf32> to vector<8x128xf32>
    %21 = arith.addf %19, %20 : vector<8x128xf32>
    %22 = vector.extract_strided_slice %21 {offsets = [0, 0], sizes = [2, 128], strides = [1, 1]} : vector<8x128xf32> to vector<2x128xf32>
    %cst_15 = arith.constant 0.000000e+00 : f32
    %23 = vector.broadcast %cst_15 : f32 to vector<2x128xf32>
    %24 = arith.subf %23, %22 : vector<2x128xf32>
    %25 = math.exp %24 : vector<2x128xf32>
    %cst_16 = arith.constant 1.000000e+00 : f32
    %26 = vector.broadcast %cst_16 : f32 to vector<2x128xf32>
    %27 = arith.addf %26, %25 : vector<2x128xf32>
    %cst_17 = arith.constant 1.000000e+00 : f32
    %28 = vector.broadcast %cst_17 : f32 to vector<2x128xf32>
    %29 = arith.divf %28, %27 : vector<2x128xf32>
    %c0_18 = arith.constant 0 : index
    %c0_19 = arith.constant 0 : index
    %30 = vector.load %arg6[%c0_18, %c0_19] : memref<2x128xf32, #tpu.memory_space<vmem>>, vector<2x128xf32>
    tpu.vector_store %arg6[%c0_18, %c0_19], %29 {strides = array<i32>} : memref<2x128xf32, #tpu.memory_space<vmem>>, vector<2x128xf32>,
    return
  }
  func.func @transform_0(%arg0: i32) -> (i32, i32) {
    %c0_i32 = arith.constant 0 : i32
    %c0_i32_0 = arith.constant 0 : i32
    return %c0_i32, %arg0 : i32, i32
  }
  func.func @transform_1(%arg0: i32) -> (i32, i32) {
    %c0_i32 = arith.constant 0 : i32
    %c0_i32_0 = arith.constant 0 : i32
    %c0_i32_1 = arith.constant 0 : i32
    return %c0_i32, %c0_i32_0 : i32, i32
  }
  func.func @transform_2(%arg0: i32) -> (i32, i32) {
    %c0_i32 = arith.constant 0 : i32
    %c0_i32_0 = arith.constant 0 : i32
    %c0_i32_1 = arith.constant 0 : i32
    return %c0_i32, %c0_i32_0 : i32, i32
  }
  func.func @transform_3(%arg0: i32) -> (i32, i32) {
    %c0_i32 = arith.constant 0 : i32
    %c0_i32_0 = arith.constant 0 : i32
    %c0_i32_1 = arith.constant 0 : i32
    return %c0_i32, %c0_i32_0 : i32, i32
  }
  func.func @transform_4(%arg0: i32) -> (i32, i32) {
    %c0_i32 = arith.constant 0 : i32
    %c0_i32_0 = arith.constant 0 : i32
    %c0_i32_1 = arith.constant 0 : i32
    return %c0_i32, %c0_i32_0 : i32, i32
  }
  func.func @transform_5(%arg0: i32) -> (i32, i32) {
    %c0_i32 = arith.constant 0 : i32
    %c0_i32_0 = arith.constant 0 : i32
    return %c0_i32, %arg0 : i32, i32
  }
}

</mosaic_0001>

<llo_original>
// kernel: tpu_custom_call.1
$region0: #{tpu_custom_call.1}
  #allocation0 [shape = 'u32[]', space=smem, size = 0x4, offset = 0x4, fixed_abs, tag = 'smem constant byte address 0x4 - core index']
  #allocation1 [shape = 'u32[144,128]{1,0:T(1,128)}', space=vmem, size = 0x12000, scoped, tag = 'internal scratch']
  %s0 = inlined_call_operand.vmem [shape: bf16[16,128], index: 0, kind: input, shape index: {}]
  %s1 = inlined_call_operand.vmem [shape: bf16[128,16], index: 1, kind: input, shape index: {}]
  %s2 = inlined_call_operand.vmem [shape: bf16[32,128], index: 2, kind: input, shape index: {}]
  %s3 = inlined_call_operand.vmem [shape: bf16[8,32], index: 3, kind: input, shape index: {}]
  %s4 = inlined_call_operand.vmem [shape: f32[168,1], index: 4, kind: input, shape index: {}]
  %s5 = inlined_call_operand.hbm [shape: f32[2,128], index: 5, kind: output, shape index: {}]
  %s6 = sld [smem:[#allocation0]]
  $region30: #{tpu_custom_call.1} parent=0
    _
  %s8 = ssub.s32 1, %s6
  %s9 = scalar_select 0, %s8, %s6
  $region1: #{tpu_custom_call.1} parent=0
    #allocation2 [shape = 'u8[1024]{0}', space=vmem, size = 0x400, scoped, tag = 'output window, operand 0, single buffered']
    #allocation3 [shape = 's32[1]{0}', space=sflag, size = 0x4, scoped, tag = 'scoped memory for tpu_custom_call.1']
    %10 = vsyncpa [#allocation3], 0
    // Predicated region
    $region2: #{tpu_custom_call.1} parent=1 // pred_check
      _
    $region3: #{tpu_custom_call.1} parent=1 // pred_check_branch
      %12 = sbr.rel (0) target = $region5
    $region4: #{tpu_custom_call.1} parent=1 // pred_region
      _
    $region5: #{tpu_custom_call.1} parent=1 // pred_fallthru
      _
    // Predicated region
    $region6: #{tpu_custom_call.1} parent=1 // pred_check
      _
    $region7: #{tpu_custom_call.1} parent=1 // pred_check_branch
      %14 = sbr.rel (0) target = $region9
    $region8: #{tpu_custom_call.1} parent=1 // pred_region
      _
    $region9: #{tpu_custom_call.1} parent=1 // pred_fallthru
      _
    // Predicated region
    $region10: #{tpu_custom_call.1} parent=1 // pred_check
      _
    $region11: #{tpu_custom_call.1} parent=1 // pred_check_branch
      %16 = sbr.rel (0) target = $region13
    $region12: #{tpu_custom_call.1} parent=1 // pred_region
      _
    $region13: #{tpu_custom_call.1} parent=1 // pred_fallthru
      _
    // Predicated region
    $region14: #{tpu_custom_call.1} parent=1 // pred_check
      _
    $region15: #{tpu_custom_call.1} parent=1 // pred_check_branch
      %18 = sbr.rel (0) target = $region17
    $region16: #{tpu_custom_call.1} parent=1 // pred_region
      _
    $region17: #{tpu_custom_call.1} parent=1 // pred_fallthru
      _
    // Predicated region
    $region18: #{tpu_custom_call.1} parent=1 // pred_check
      _
    $region19: #{tpu_custom_call.1} parent=1 // pred_check_branch
      %20 = sbr.rel (0) target = $region21
    $region20: #{tpu_custom_call.1} parent=1 // pred_region
      _
    $region21: #{tpu_custom_call.1} parent=1 // pred_fallthru
      _
    %v22 = vld [vmem:[%s0] sm:$0xf]
    %v23 = vld [vmem:[%s0 + $0x4] sm:$0xf]
    %v24 = vld [vmem:[%s1] sm:$0xf]
    %v25 = vld [vmem:[%s1 + $0x4] sm:$0xf]
    %v26 = vld [vmem:[%s1 + $0x8] sm:$0xf]
    %v27 = vld [vmem:[%s1 + $0xc] sm:$0xf]
    %v28 = vld [vmem:[%s1 + $0x10] sm:$0xf]
    %v29 = vld [vmem:[%s1 + $0x14] sm:$0xf]
    %v30 = vld [vmem:[%s1 + $0x18] sm:$0xf]
    %v31 = vld [vmem:[%s1 + $0x1c] sm:$0xf]
    %v32 = vld [vmem:[%s1 + $0x20] sm:$0xf]
    %v33 = vld [vmem:[%s1 + $0x24] sm:$0xf]
    %v34 = vld [vmem:[%s1 + $0x28] sm:$0xf]
    %v35 = vld [vmem:[%s1 + $0x2c] sm:$0xf]
    %v36 = vld [vmem:[%s1 + $0x30] sm:$0xf]
    %v37 = vld [vmem:[%s1 + $0x34] sm:$0xf]
    %v38 = vld [vmem:[%s1 + $0x38] sm:$0xf]
    %v39 = vld [vmem:[%s1 + $0x3c] sm:$0xf]
    %v40 = vld [vmem:[%s2] sm:$0xf]
    %v41 = vld [vmem:[%s2 + $0x4] sm:$0xf]
    %v42 = vld [vmem:[%s2 + $0x8] sm:$0xf]
    %v43 = vld [vmem:[%s2 + $0xc] sm:$0xf]
    %v44 = vld [vmem:[%s3] sm:$0xf]
    %v45 = vld [vmem:[%s4] sm:$0xff]
    %v46 = vld [vmem:[%s4 + $0x8] sm:$0xff]
    %v47 = vld [vmem:[%s4 + $0x10] sm:$0xff]
    %v48 = vld [vmem:[%s4 + $0x18] sm:$0xff]
    %v49 = vld [vmem:[%s4 + $0x20] sm:$0xff]
    %v50 = vld [vmem:[%s4 + $0x28] sm:$0xff]
    %v51 = vld [vmem:[%s4 + $0x30] sm:$0xff]
    %v52 = vld [vmem:[%s4 + $0x38] sm:$0xff]
    %v53 = vld [vmem:[%s4 + $0x40] sm:$0xff]
    %v54 = vld [vmem:[%s4 + $0x48] sm:$0xff]
    %v55 = vld [vmem:[%s4 + $0x50] sm:$0xff]
    %v56 = vld [vmem:[%s4 + $0x58] sm:$0xff]
    %v57 = vld [vmem:[%s4 + $0x60] sm:$0xff]
    %v58 = vld [vmem:[%s4 + $0x68] sm:$0xff]
    %v59 = vld [vmem:[%s4 + $0x70] sm:$0xff]
    %v60 = vld [vmem:[%s4 + $0x78] sm:$0xff]
    %v61 = vld [vmem:[%s4 + $0x80] sm:$0xff]
    %v62 = vld [vmem:[%s4 + $0x88] sm:$0xff]
    %v63 = vld [vmem:[%s4 + $0x90] sm:$0xff]
    %v64 = vld [vmem:[%s4 + $0x98] sm:$0xff]
    %v65 = vld [vmem:[%s4 + $0xa0] sm:$0xff]
    %67 = vset.pattern.permute.xlu0 0
    %68 = vperm.xlu0 %67, %v45
    %v69 = vpop.permute.xlu0 %68
    %72 = vset.pattern.permute.xlu0 0
    %73 = vperm.xlu0 %72, %v46
    %v74 = vpop.permute.xlu0 %73
    %77 = vset.pattern.permute.xlu0 0
    %78 = vperm.xlu0 %77, %v47
    %v79 = vpop.permute.xlu0 %78
    %82 = vset.pattern.permute.xlu0 0
    %83 = vperm.xlu0 %82, %v48
    %v84 = vpop.permute.xlu0 %83
    %87 = vset.pattern.permute.xlu0 0
    %88 = vperm.xlu0 %87, %v49
    %v89 = vpop.permute.xlu0 %88
    %92 = vset.pattern.permute.xlu0 0
    %93 = vperm.xlu0 %92, %v50
    %v94 = vpop.permute.xlu0 %93
    %97 = vset.pattern.permute.xlu0 0
    %98 = vperm.xlu0 %97, %v51
    %v99 = vpop.permute.xlu0 %98
    %102 = vset.pattern.permute.xlu0 0
    %103 = vperm.xlu0 %102, %v52
    %v104 = vpop.permute.xlu0 %103
    %107 = vset.pattern.permute.xlu0 0
    %108 = vperm.xlu0 %107, %v53
    %v109 = vpop.permute.xlu0 %108
    %112 = vset.pattern.permute.xlu0 0
    %113 = vperm.xlu0 %112, %v54
    %v114 = vpop.permute.xlu0 %113
    %117 = vset.pattern.permute.xlu0 0
    %118 = vperm.xlu0 %117, %v55
    %v119 = vpop.permute.xlu0 %118
    %122 = vset.pattern.permute.xlu0 0
    %123 = vperm.xlu0 %122, %v56
    %v124 = vpop.permute.xlu0 %123
    %127 = vset.pattern.permute.xlu0 0
    %128 = vperm.xlu0 %127, %v57
    %v129 = vpop.permute.xlu0 %128
    %132 = vset.pattern.permute.xlu0 0
    %133 = vperm.xlu0 %132, %v58
    %v134 = vpop.permute.xlu0 %133
    %137 = vset.pattern.permute.xlu0 0
    %138 = vperm.xlu0 %137, %v59
    %v139 = vpop.permute.xlu0 %138
    %142 = vset.pattern.permute.xlu0 0
    %143 = vperm.xlu0 %142, %v60
    %v144 = vpop.permute.xlu0 %143
    %v162 = vunpack.c.l.b16 %v24
    %v163 = vunpack.c.l.b16 %v25
    %v164 = vunpack.c.l.b16 %v26
    %v165 = vunpack.c.l.b16 %v27
    %v166 = vunpack.c.l.b16 %v28
    %v167 = vunpack.c.l.b16 %v29
    %v168 = vunpack.c.l.b16 %v30
    %v169 = vunpack.c.l.b16 %v31
    %v170 = vunpack.c.l.b16 %v32
    %v171 = vunpack.c.l.b16 %v33
    %v172 = vunpack.c.l.b16 %v34
    %v173 = vunpack.c.l.b16 %v35
    %v174 = vunpack.c.l.b16 %v36
    %v175 = vunpack.c.l.b16 %v37
    %v176 = vunpack.c.l.b16 %v38
    %v177 = vunpack.c.l.b16 %v39
    %v178 = vpack.c.b16 %v163, %v162
    %v179 = vpack.c.b16 %v165, %v164
    %v180 = vpack.c.b16 %v167, %v166
    %v181 = vpack.c.b16 %v169, %v168
    %v182 = vpack.c.b16 %v171, %v170
    %v183 = vpack.c.b16 %v173, %v172
    %v184 = vpack.c.b16 %v175, %v174
    %v185 = vpack.c.b16 %v177, %v176
    %v188 = vunpack.c.l.b16 %v22
    %v189 = vunpack.c.l.b16 %v23
    %v190 = vpack.c.b16 %v189, %v188
    %vm192 = vcmask 130048
    %v194 = vsel %vm192, %v178, 0
    %v197 = vsel %vm192, %v179, 0
    %v200 = vsel %vm192, %v180, 0
    %v203 = vsel %vm192, %v181, 0
    %v206 = vsel %vm192, %v182, 0
    %v209 = vsel %vm192, %v183, 0
    %v212 = vsel %vm192, %v184, 0
    %v215 = vsel %vm192, %v185, 0
    %217 = vmatprep.subr.bf16.mxu0 0
    %218 = vmatpush1.bf16.msra.mxu0 %v190
    %219 = vmatprep.subr.bf16.mxu0 0
    %220 = vmatpush1.bf16.msra.mxu0 0
    %221 = vmatprep.subr.bf16.mxu0 0
    %222 = vmatpush1.bf16.msra.mxu0 0
    %223 = vmatprep.subr.bf16.mxu0 0
    %224 = vmatpush1.bf16.msra.mxu0 0
    %225 = vmatprep.subr.bf16.mxu0 0
    %226 = vmatpush1.bf16.msra.mxu0 0
    %227 = vmatprep.subr.bf16.mxu0 0
    %228 = vmatpush1.bf16.msra.mxu0 0
    %229 = vmatprep.subr.bf16.mxu0 0
    %230 = vmatpush1.bf16.msra.mxu0 0
    %231 = vmatprep.subr.bf16.mxu0 0
    %232 = vmatpush1.bf16.msra.mxu0 0
    %233 = vmatprep.subr.bf16.mxu0 0
    %234 = vmatpush1.bf16.msra.mxu0 0
    %235 = vmatprep.subr.bf16.mxu0 0
    %236 = vmatpush1.bf16.msra.mxu0 0
    %237 = vmatprep.subr.bf16.mxu0 0
    %238 = vmatpush1.bf16.msra.mxu0 0
    %239 = vmatprep.subr.bf16.mxu0 0
    %240 = vmatpush1.bf16.msra.mxu0 0
    %241 = vmatprep.subr.bf16.mxu0 0
    %242 = vmatpush1.bf16.msra.mxu0 0
    %243 = vmatprep.subr.bf16.mxu0 0
    %244 = vmatpush1.bf16.msra.mxu0 0
    %245 = vmatprep.subr.bf16.mxu0 0
    %246 = vmatpush1.bf16.msra.mxu0 0
    %247 = vmatprep.subr.bf16.mxu0 0
    %248 = vmatpush1.bf16.msra.mxu0 0
    %249 = vmatprep.mubr.bf16.mxu0 0
    %250 = vmatmul.mubr.bf16.gmra.mrb[0].mxu0 %v194
    %v251 = vpop.f32.mrb[0].mxu0
    %v252 = vadd.f32 %v69, %v251
    %v253 = vpop.f32.mrb[0].mxu0
    %v254 = vpop.f32.mrb[0].mxu0
    %v255 = vadd.f32 %v74, %v254
    %v256 = vpop.f32.mrb[0].mxu0
    %257 = vmatprep.mubr.bf16.mxu0 0
    %258 = vmatmul.mubr.bf16.gmra.mrb[0].mxu0 %v197
    %v259 = vpop.f32.mrb[0].mxu0
    %v260 = vadd.f32 %v79, %v259
    %v261 = vpop.f32.mrb[0].mxu0
    %v262 = vpop.f32.mrb[0].mxu0
    %v263 = vadd.f32 %v84, %v262
    %v264 = vpop.f32.mrb[0].mxu0
    %265 = vmatprep.mubr.bf16.mxu0 0
    %266 = vmatmul.mubr.bf16.gmra.mrb[0].mxu0 %v200
    %v267 = vpop.f32.mrb[0].mxu0
    %v268 = vadd.f32 %v89, %v267
    %v269 = vpop.f32.mrb[0].mxu0
    %v270 = vpop.f32.mrb[0].mxu0
    %v271 = vadd.f32 %v94, %v270
    %v272 = vpop.f32.mrb[0].mxu0
    %273 = vmatprep.mubr.bf16.mxu0 0
    %274 = vmatmul.mubr.bf16.gmra.mrb[0].mxu0 %v203
    %v275 = vpop.f32.mrb[0].mxu0
    %v276 = vadd.f32 %v99, %v275
    %v277 = vpop.f32.mrb[0].mxu0
    %v278 = vpop.f32.mrb[0].mxu0
    %v279 = vadd.f32 %v104, %v278
    %v280 = vpop.f32.mrb[0].mxu0
    %281 = vmatprep.mubr.bf16.mxu0 0
    %282 = vmatmul.mubr.bf16.gmra.mrb[0].mxu0 %v206
    %v283 = vpop.f32.mrb[0].mxu0
    %v284 = vadd.f32 %v109, %v283
    %v285 = vpop.f32.mrb[0].mxu0
    %v286 = vpop.f32.mrb[0].mxu0
    %v287 = vadd.f32 %v114, %v286
    %v288 = vpop.f32.mrb[0].mxu0
    %289 = vmatprep.mubr.bf16.mxu0 0
    %290 = vmatmul.mubr.bf16.gmra.mrb[0].mxu0 %v209
    %v291 = vpop.f32.mrb[0].mxu0
    %v292 = vadd.f32 %v119, %v291
    %v293 = vpop.f32.mrb[0].mxu0
    %v294 = vpop.f32.mrb[0].mxu0
    %v295 = vadd.f32 %v124, %v294
    %v296 = vpop.f32.mrb[0].mxu0
    %297 = vmatprep.mubr.bf16.mxu0 0
    %298 = vmatmul.mubr.bf16.gmra.mrb[0].mxu0 %v212
    %v299 = vpop.f32.mrb[0].mxu0
    %v300 = vadd.f32 %v129, %v299
    %v301 = vpop.f32.mrb[0].mxu0
    %v302 = vpop.f32.mrb[0].mxu0
    %v303 = vadd.f32 %v134, %v302
    %v304 = vpop.f32.mrb[0].mxu0
    %305 = vmatprep.mubr.bf16.mxu0 0
    %306 = vmatmul.mubr.bf16.gmra.mrb[0].mxu0 %v215
    %v307 = vpop.f32.mrb[0].mxu0
    %v308 = vadd.f32 %v139, %v307
    %v309 = vpop.f32.mrb[0].mxu0
    %v310 = vpop.f32.mrb[0].mxu0
    %v311 = vadd.f32 %v144, %v310
    %v312 = vpop.f32.mrb[0].mxu0
    %313 = vdwg.mxu0
    %v314 = vmax.f32 %v252, 0.0
    %v315 = vmax.f32 %v255, 0.0
    %v316 = vmax.f32 %v260, 0.0
    %v317 = vmax.f32 %v263, 0.0
    %v318 = vmax.f32 %v268, 0.0
    %v319 = vmax.f32 %v271, 0.0
    %v320 = vmax.f32 %v276, 0.0
    %v321 = vmax.f32 %v279, 0.0
    %v322 = vmax.f32 %v284, 0.0
    %v323 = vmax.f32 %v287, 0.0
    %v324 = vmax.f32 %v292, 0.0
    %v325 = vmax.f32 %v295, 0.0
    %v326 = vmax.f32 %v300, 0.0
    %v327 = vmax.f32 %v303, 0.0
    %v328 = vmax.f32 %v308, 0.0
    %v329 = vmax.f32 %v311, 0.0
    %v330 = vpack.c.bf16 %v315, %v314
    %v331 = vpack.c.bf16 %v317, %v316
    %v332 = vpack.c.bf16 %v319, %v318
    %v333 = vpack.c.bf16 %v321, %v320
    %v334 = vpack.c.bf16 %v323, %v322
    %v335 = vpack.c.bf16 %v325, %v324
    %v336 = vpack.c.bf16 %v327, %v326
    %v337 = vpack.c.bf16 %v329, %v328
    %339 = vset.pattern.permute.xlu0 0
    %340 = vperm.xlu0 %339, %v61
    %v341 = vpop.permute.xlu0 %340
    %344 = vset.pattern.permute.xlu0 0
    %345 = vperm.xlu0 %344, %v62
    %v346 = vpop.permute.xlu0 %345
    %349 = vset.pattern.permute.xlu0 0
    %350 = vperm.xlu0 %349, %v63
    %v351 = vpop.permute.xlu0 %350
    %354 = vset.pattern.permute.xlu0 0
    %355 = vperm.xlu0 %354, %v64
    %v356 = vpop.permute.xlu0 %355
    %v362 = vunpack.c.l.b16 %v40
    %v363 = vunpack.c.l.b16 %v41
    %v364 = vunpack.c.l.b16 %v42
    %v365 = vunpack.c.l.b16 %v43
    %v366 = vpack.c.b16 %v363, %v362
    %v367 = vpack.c.b16 %v365, %v364
    %370 = vmatprep.subr.bf16.mxu0 0
    %371 = vmatpush1.bf16.msra.mxu0 %v330
    %372 = vmatprep.subr.bf16.mxu0 0
    %373 = vmatpush1.bf16.msra.mxu0 %v331
    %374 = vmatprep.subr.bf16.mxu0 0
    %375 = vmatpush1.bf16.msra.mxu0 %v332
    %376 = vmatprep.subr.bf16.mxu0 0
    %377 = vmatpush1.bf16.msra.mxu0 %v333
    %378 = vmatprep.subr.bf16.mxu0 0
    %379 = vmatpush1.bf16.msra.mxu0 %v334
    %380 = vmatprep.subr.bf16.mxu0 0
    %381 = vmatpush1.bf16.msra.mxu0 %v335
    %382 = vmatprep.subr.bf16.mxu0 0
    %383 = vmatpush1.bf16.msra.mxu0 %v336
    %384 = vmatprep.subr.bf16.mxu0 0
    %385 = vmatpush1.bf16.msra.mxu0 %v337
    %386 = vmatprep.subr.bf16.mxu0 0
    %387 = vmatpush1.bf16.msra.mxu0 0
    %388 = vmatprep.subr.bf16.mxu0 0
    %389 = vmatpush1.bf16.msra.mxu0 0
    %390 = vmatprep.subr.bf16.mxu0 0
    %391 = vmatpush1.bf16.msra.mxu0 0
    %392 = vmatprep.subr.bf16.mxu0 0
    %393 = vmatpush1.bf16.msra.mxu0 0
    %394 = vmatprep.subr.bf16.mxu0 0
    %395 = vmatpush1.bf16.msra.mxu0 0
    %396 = vmatprep.subr.bf16.mxu0 0
    %397 = vmatpush1.bf16.msra.mxu0 0
    %398 = vmatprep.subr.bf16.mxu0 0
    %399 = vmatpush1.bf16.msra.mxu0 0
    %400 = vmatprep.subr.bf16.mxu0 0
    %401 = vmatpush1.bf16.msra.mxu0 0
    %402 = vmatprep.mubr.bf16.mxu0 0
    %403 = vmatmul.mubr.bf16.gmra.mrb[0].mxu0 %v366
    %v404 = vpop.f32.mrb[0].mxu0
    %v405 = vadd.f32 %v341, %v404
    %v406 = vpop.f32.mrb[0].mxu0
    %v407 = vpop.f32.mrb[0].mxu0
    %v408 = vadd.f32 %v346, %v407
    %v409 = vpop.f32.mrb[0].mxu0
    %410 = vmatprep.mubr.bf16.mxu0 0
    %411 = vmatmul.mubr.bf16.gmra.mrb[0].mxu0 %v367
    %v412 = vpop.f32.mrb[0].mxu0
    %v413 = vadd.f32 %v351, %v412
    %v414 = vpop.f32.mrb[0].mxu0
    %v415 = vpop.f32.mrb[0].mxu0
    %v416 = vadd.f32 %v356, %v415
    %v417 = vpop.f32.mrb[0].mxu0
    %418 = vdwg.mxu0
    %v419 = vmax.f32 %v405, 0.0
    %v420 = vmax.f32 %v408, 0.0
    %v421 = vmax.f32 %v413, 0.0
    %v422 = vmax.f32 %v416, 0.0
    %v423 = vpack.c.bf16 %v420, %v419
    %v424 = vpack.c.bf16 %v422, %v421
    %426 = vset.pattern.permute.xlu0 0
    %427 = vperm.xlu0 %426, %v65
    %v428 = vpop.permute.xlu0 %427
    %vm430 = vcmask 261120
    %v432 = vsel %vm430, %v44, 0
    %434 = vmatprep.subr.bf16.mxu0 0
    %435 = vmatpush1.bf16.msra.mxu0 %v423
    %436 = vmatprep.subr.bf16.mxu0 0
    %437 = vmatpush1.bf16.msra.mxu0 %v424
    %438 = vmatprep.subr.bf16.mxu0 0
    %439 = vmatpush1.bf16.msra.mxu0 0
    %440 = vmatprep.subr.bf16.mxu0 0
    %441 = vmatpush1.bf16.msra.mxu0 0
    %442 = vmatprep.subr.bf16.mxu0 0
    %443 = vmatpush1.bf16.msra.mxu0 0
    %444 = vmatprep.subr.bf16.mxu0 0
    %445 = vmatpush1.bf16.msra.mxu0 0
    %446 = vmatprep.subr.bf16.mxu0 0
    %447 = vmatpush1.bf16.msra.mxu0 0
    %448 = vmatprep.subr.bf16.mxu0 0
    %449 = vmatpush1.bf16.msra.mxu0 0
    %450 = vmatprep.subr.bf16.mxu0 0
    %451 = vmatpush1.bf16.msra.mxu0 0
    %452 = vmatprep.subr.bf16.mxu0 0
    %453 = vmatpush1.bf16.msra.mxu0 0
    %454 = vmatprep.subr.bf16.mxu0 0
    %455 = vmatpush1.bf16.msra.mxu0 0
    %456 = vmatprep.subr.bf16.mxu0 0
    %457 = vmatpush1.bf16.msra.mxu0 0
    %458 = vmatprep.subr.bf16.mxu0 0
    %459 = vmatpush1.bf16.msra.mxu0 0
    %460 = vmatprep.subr.bf16.mxu0 0
    %461 = vmatpush1.bf16.msra.mxu0 0
    %462 = vmatprep.subr.bf16.mxu0 0
    %463 = vmatpush1.bf16.msra.mxu0 0
    %464 = vmatprep.subr.bf16.mxu0 0
    %465 = vmatpush1.bf16.msra.mxu0 0
    %466 = vmatprep.mubr.bf16.mxu0 0
    %467 = vmatmul.mubr.bf16.gmra.mrb[0].mxu0 %v432
    %v468 = vpop.f32.mrb[0].mxu0
    %v469 = vadd.f32 %v428, %v468
    %v470 = vpop.f32.mrb[0].mxu0
    %v471 = vpop.f32.mrb[0].mxu0
    %v472 = vpop.f32.mrb[0].mxu0
    %473 = vdwg.mxu0
    %v474 = vsub.f32 0.0, %v469
    %v475 = vmul.f32 %v474, 1.442695
    %v476 = vpow.pop %v475
    %v477 = vadd.f32 %v476, 1.0
    %v478 = vrcp.pop %v477
    %v479 = vmul.f32 1.0, %v478
    %480 = vst [vmem:[#allocation2] sm:$0x3] %v479
    // Predicated region
    $region22: #{tpu_custom_call.1} parent=1 // pred_check
      _
    $region23: #{tpu_custom_call.1} parent=1 // pred_check_branch
      %482 = sbr.rel (0) target = $region25
    $region24: #{tpu_custom_call.1} parent=1 // pred_region
      %s484 = ssub.s32 32, 32
      %485 = vsyncadd [#allocation3], %s484
      %s487 = sshll.u32 [#allocation2], 4
      %s488 = int_to_ptr.vmem [resolvable:$true] %s487
      %490 = dma.vmem_to_hbm [thread:$0]  %s488, 32, %s5, [#allocation3]
    $region25: #{tpu_custom_call.1} parent=1 // pred_fallthru
      _
    // Predicated region
    $region26: #{tpu_custom_call.1} parent=1 // pred_check
      _
    $region27: #{tpu_custom_call.1} parent=1 // pred_check_branch
      %492 = sbr.rel (0) target = $region29
    $region28: #{tpu_custom_call.1} parent=1 // pred_region
      %493 = dma.done [#allocation3], 32
    $region29: #{tpu_custom_call.1} parent=1 // pred_fallthru
      _
    %494 = vsyncpa [#allocation3], 1

</llo_original>
